<compile_context>
chip_gen: v5e
topology: v5e:2x2
jax: 0.10.0
libtpu: 0.0.40
codegen_flags: <defaults>
</compile_context>

<pallas_src>
import jax
import jax.numpy as jnp
from jax.experimental import pallas as pl
from jax.experimental.pallas import tpu as pltpu

_VMEM_LIMIT = 48 * 1024 * 1024  # headroom even on v7x's 64 MiB physical VMEM


def _round_up(x, m):
    return ((x + m - 1) // m) * m


def _pick_batch_tile(batch, cap=512):
    # >=8 rows (sublane), <=cap, and aim for >=2 grid steps so the "parallel"
    # batch axis can shard across both v7x TensorCores.
    half = _round_up(pl.cdiv(batch, 2), 8)
    return max(8, min(cap, half))


# ---------------------------------------------------------------------------
# Kernels
# ---------------------------------------------------------------------------
def _fused_multi_kernel(x_ref, we1_ref, be1_ref, wf1_ref, bf1_ref,
                        w2_ref, b2_ref, o_ref):
    """One batch tile, ALL tasks: embedding L1 + folded head L1 + block-diag head L2."""
    bf, f32 = jnp.bfloat16, jnp.float32
    x = x_ref[...].astype(bf)
    # embedding layer-1 (its layer-2 is folded into wf1/bf1)
    a = jnp.dot(x, we1_ref[...], preferred_element_type=f32) + be1_ref[...]
    a = jnp.maximum(a, 0.0)
    # all heads' layer-1, packed along N:                    (bt, n_tasks*h1)
    h = jnp.dot(a.astype(bf), wf1_ref[...], preferred_element_type=f32) + bf1_ref[...]
    h = jnp.maximum(h, 0.0)
    # heads layer-2, block-diagonal, task-interleaved cols:  (bt, output_dim*n_tasks)
    y = jnp.dot(h.astype(bf), w2_ref[...], preferred_element_type=f32) + b2_ref[...]
    o_ref[...] = y.astype(o_ref.dtype)


def _single_task_kernel(tid_ref, x_ref, we1_ref, be1_ref, wf1_ref, bf1_ref,
                        w2_ref, b2_ref, o_ref):
    """One batch tile, one task (selected via scalar-prefetch index_maps)."""
    del tid_ref  # task selection happens in the BlockSpec index_maps
    bf, f32 = jnp.bfloat16, jnp.float32
    x = x_ref[...].astype(bf)
    a = jnp.dot(x, we1_ref[...], preferred_element_type=f32) + be1_ref[...]
    a = jnp.maximum(a, 0.0)
    h = jnp.dot(a.astype(bf), wf1_ref[0], preferred_element_type=f32) + bf1_ref[0]
    h = jnp.maximum(h, 0.0)
    y = jnp.dot(h.astype(bf), w2_ref[0], preferred_element_type=f32) + b2_ref[0]
    o_ref[...] = y.astype(o_ref.dtype)


# ---------------------------------------------------------------------------
# pallas_call wrappers
# ---------------------------------------------------------------------------
def _run_fused(x, we1, be1, wf1p, bf1p, w2bd, b2p, *, batch_tile=512):
    batch, input_dim = x.shape
    h0 = we1.shape[1]
    n_mid = wf1p.shape[1]                 # n_tasks * h1
    n_out = w2bd.shape[1]                 # output_dim * n_tasks
    bt = _pick_batch_tile(batch, batch_tile)
    grid = (pl.cdiv(batch, bt),)

    flops = int(2 * batch * (input_dim * h0 + h0 * n_mid + n_mid * n_out))
    bytes_accessed = int(
        x.size * x.dtype.itemsize + batch * n_out * x.dtype.itemsize
        + (we1.size + wf1p.size + w2bd.size) * 2
        + (be1.size + bf1p.size + b2p.size) * 4)

    full2 = lambda i: (0, 0)              # weights/biases resident every step
    return pl.pallas_call(
        _fused_multi_kernel,
        out_shape=jax.ShapeDtypeStruct((batch, n_out), x.dtype),
        grid_spec=pltpu.PrefetchScalarGridSpec(
            num_scalar_prefetch=0,
            grid=grid,
            in_specs=[
                pl.BlockSpec((bt, input_dim), lambda i: (i, 0)),   # x batch tile
                pl.BlockSpec(we1.shape, full2),
                pl.BlockSpec(be1.shape, full2),
                pl.BlockSpec(wf1p.shape, full2),
                pl.BlockSpec(bf1p.shape, full2),
                pl.BlockSpec(w2bd.shape, full2),
                pl.BlockSpec(b2p.shape, full2),
            ],
            out_specs=pl.BlockSpec((bt, n_out), lambda i: (i, 0)),
        ),
        compiler_params=pltpu.CompilerParams(
            dimension_semantics=("parallel",),
            vmem_limit_bytes=_VMEM_LIMIT),
        cost_estimate=pl.CostEstimate(flops=flops, transcendentals=0,
                                      bytes_accessed=bytes_accessed),
    )(x, we1, be1, wf1p, bf1p, w2bd, b2p)


def _run_single(task_id, x, we1, be1, wf1, bf1s, w2, b2s, *, batch_tile=512):
    batch, input_dim = x.shape
    h0, h1 = wf1.shape[1], wf1.shape[2]
    output_dim = w2.shape[-1]
    bt = _pick_batch_tile(batch, batch_tile)
    grid = (pl.cdiv(batch, bt),)

    flops = int(2 * batch * (input_dim * h0 + h0 * h1 + h1 * output_dim))
    bytes_accessed = int(
        x.size * x.dtype.itemsize + batch * output_dim * x.dtype.itemsize
        + (we1.size + h0 * h1 + h1 * output_dim) * 2
        + (be1.size + h1 + output_dim) * 4)

    full2 = lambda i, tid: (0, 0)
    return pl.pallas_call(
        _single_task_kernel,
        out_shape=jax.ShapeDtypeStruct((batch, output_dim), x.dtype),
        grid_spec=pltpu.PrefetchScalarGridSpec(
            num_scalar_prefetch=1,        # task_id -> SMEM, used only in index_maps
            grid=grid,
            in_specs=[
                pl.BlockSpec((bt, input_dim), lambda i, tid: (i, 0)),
                pl.BlockSpec(we1.shape, full2),
                pl.BlockSpec(be1.shape, full2),
                pl.BlockSpec((1, h0, h1), lambda i, tid: (tid[0], 0, 0)),
                pl.BlockSpec((1, 1, h1), lambda i, tid: (tid[0], 0, 0)),
                pl.BlockSpec((1, h1, output_dim), lambda i, tid: (tid[0], 0, 0)),
                pl.BlockSpec((1, 1, output_dim), lambda i, tid: (tid[0], 0, 0)),
            ],
            out_specs=pl.BlockSpec((bt, output_dim), lambda i, tid: (i, 0)),
        ),
        compiler_params=pltpu.CompilerParams(
            dimension_semantics=("parallel",),
            vmem_limit_bytes=_VMEM_LIMIT),
        cost_estimate=pl.CostEstimate(flops=flops, transcendentals=0,
                                      bytes_accessed=bytes_accessed),
    )(task_id, x, we1, be1, wf1, bf1s, w2, b2s)


# ---------------------------------------------------------------------------
# Module wrapper
# ---------------------------------------------------------------------------
class SharedEmbeddingMultiOutputNetPallas:
    """Pallas port of SharedEmbeddingMultiOutputNet.

    The torch module feeds the embedding output (shared_dim wide) into heads built
    with in_features = hidden_dim[0]; it therefore implies shared_dim == hidden_dim[0].
    """

    def __init__(self, n_tasks, input_dim, shared_dim, hidden_dim, output_dim, key):
        h0, h1 = int(hidden_dim[0]), int(hidden_dim[1])
        assert shared_dim == h0, "torch module implies shared_dim == hidden_dim[0]"
        self.n_tasks, self.output_dim = n_tasks, output_dim

        ks = jax.random.split(key, 8)

        def uni(k, shape, fan_in):
            lim = 1.0 / float(fan_in) ** 0.5    # PyTorch-Linear-style uniform bounds
            return jax.random.uniform(k, shape, jnp.float32, -lim, lim)

        # shared embedding: Linear(input_dim, h0) -> ReLU -> Linear(h0, shared_dim)
        we1 = uni(ks[0], (input_dim, h0), input_dim)
        be1 = uni(ks[1], (1, h0), input_dim)
        we2 = uni(ks[2], (h0, shared_dim), h0)
        be2 = uni(ks[3], (1, shared_dim), h0)
        # per-task heads: Linear(shared_dim, h1) -> ReLU -> Linear(h1, output_dim)
        w1 = uni(ks[4], (n_tasks, shared_dim, h1), shared_dim)
        b1 = uni(ks[5], (n_tasks, h1), shared_dim)
        w2 = uni(ks[6], (n_tasks, h1, output_dim), h1)
        b2 = uni(ks[7], (n_tasks, output_dim), h1)

        bf = jnp.bfloat16
        self.we1, self.be1 = we1.astype(bf), be1

        # Fold embedding layer-2 into head layer-1 (no ReLU between them); in f32.
        #   wf1[t] = we2 @ w1[t]         (n_tasks, h0, h1)
        #   bf1[t] = be2 @ w1[t] + b1[t] (n_tasks, h1)
        wf1 = jnp.einsum("hs,tsk->thk", we2, w1)
        bf1 = jnp.einsum("s,tsk->tk", be2[0], w1) + b1

        # single-task path: stacked per-task operands (bf16 weights, f32 biases).
        self.wf1 = wf1.astype(bf)                     # (n_tasks, h0, h1)
        self.bf1 = bf1                                # (n_tasks, h1)  (reference use)
        self.bf1_stacked = bf1[:, None, :]            # (n_tasks, 1, h1)
        self.w2 = w2.astype(bf)                       # (n_tasks, h1, output_dim)
        self.b2 = b2                                  # (n_tasks, output_dim)
        self.b2_stacked = b2[:, None, :]              # (n_tasks, 1, output_dim)

        # all-tasks path: head layer-1 packed along N (column = t*h1 + k);
        # layer-2 block-diagonal with output column = o*n_tasks + t, so the
        # (batch, output_dim*n_tasks) kernel slab reshapes straight to
        # (batch, output_dim, n_tasks) == torch.stack(..., dim=-1).
        self.wf1_packed = jnp.transpose(wf1, (1, 0, 2)).reshape(
            h0, n_tasks * h1).astype(bf)
        self.bf1_packed = bf1.reshape(1, n_tasks * h1)
        eye = jnp.eye(n_tasks, dtype=jnp.float32)
        self.w2_blockdiag = jnp.einsum("tko,ts->tkos", w2, eye).reshape(
            n_tasks * h1, output_dim * n_tasks).astype(bf)
        self.b2_packed = b2.T.reshape(1, output_dim * n_tasks)

    def __call__(self, x, task_id=None):
        if task_id is None:
            y = _run_fused(x, self.we1, self.be1, self.wf1_packed, self.bf1_packed,
                           self.w2_blockdiag, self.b2_packed)
            return y.reshape(x.shape[0], self.output_dim, self.n_tasks)
        tid = jnp.asarray([task_id], dtype=jnp.int32)   # works for int or traced id
        return _run_single(tid, x, self.we1, self.be1, self.wf1, self.bf1_stacked,
                           self.w2, self.b2_stacked)


# ---------------------------------------------------------------------------
# Pure-JAX reference (same folded bf16-operand / f32-accumulate math, unfused)
# ---------------------------------------------------------------------------
def _reference(x, net):
    bf, f32 = jnp.bfloat16, jnp.float32
    dot = lambda a, w: jnp.dot(a.astype(bf), w, preferred_element_type=f32)
    a = jnp.maximum(dot(x, net.we1) + net.be1, 0.0)
    ys = []
    for t in range(net.n_tasks):
        h = jnp.maximum(dot(a, net.wf1[t]) + net.bf1[t], 0.0)
        ys.append(dot(h, net.w2[t]) + net.b2[t])
    return jnp.stack(ys, axis=-1)                       # (batch, output_dim, n_tasks)


if __name__ == "__main__":
    key = jax.random.PRNGKey(0)
    k_param, k_x = jax.random.split(key)

    n_tasks = 3
    input_dim = 32
    shared_dim = 32
    hidden_dim = (32, 32)   # (embedding hidden, head hidden); shared_dim == hidden_dim[0]
    output_dim = 8
    batch = 20              # -> 2 grid steps with a ragged last tile (exercises masking)

    net = SharedEmbeddingMultiOutputNetPallas(
        n_tasks, input_dim, shared_dim, hidden_dim, output_dim, k_param)
    x = jax.random.normal(k_x, (batch, input_dim), jnp.float32)

    # all-tasks path (== torch.stack([head_t(emb(x))], dim=-1))
    y_all = net(x)
    jax.block_until_ready(y_all)
    assert y_all.shape == (batch, output_dim, n_tasks)

    # single-task path
    y_one = net(x, task_id=1)
    jax.block_until_ready(y_one)
    assert y_one.shape == (batch, output_dim)

    # correctness vs pure-JAX reference
    ref = _reference(x, net)
    assert jnp.allclose(y_all, ref, atol=2e-3, rtol=2e-3), \
        float(jnp.max(jnp.abs(y_all - ref)))
    assert jnp.allclose(y_one, ref[:, :, 1], atol=2e-3, rtol=2e-3), \
        float(jnp.max(jnp.abs(y_one - ref[:, :, 1])))

    print("KERNEL_OK")
</pallas_src>

<mosaic_0001>
module attributes {stable_mosaic.version = 11 : i64} {
  func.func @_fused_multi_kernel(%arg0: i32, %arg1: memref<16x32xf32, #tpu.memory_space<vmem>>, %arg2: memref<32x32xbf16, #tpu.memory_space<vmem>>, %arg3: memref<1x32xf32, #tpu.memory_space<vmem>>, %arg4: memref<32x96xbf16, #tpu.memory_space<vmem>>, %arg5: memref<1x96xf32, #tpu.memory_space<vmem>>, %arg6: memref<96x24xbf16, #tpu.memory_space<vmem>>, %arg7: memref<1x24xf32, #tpu.memory_space<vmem>>, %arg8: memref<16x24xf32, #tpu.memory_space<vmem>>) attributes {dimension_semantics = [#tpu.dimension_semantics<parallel>], iteration_bounds = array<i64: 2>, scalar_prefetch = 0 : i64, scratch_operands = 0 : i64, tpu.core_type = #tpu.core_type<tc>, window_params = [{transform_indices = @transform_0, window_bounds = array<i64: 16, 32>}, {pipeline_mode = #tpu.pipeline_mode<synchronous>, transform_indices = @transform_1, window_bounds = array<i64: 32, 32>}, {pipeline_mode = #tpu.pipeline_mode<synchronous>, transform_indices = @transform_2, window_bounds = array<i64: 1, 32>}, {pipeline_mode = #tpu.pipeline_mode<synchronous>, transform_indices = @transform_3, window_bounds = array<i64: 32, 96>}, {pipeline_mode = #tpu.pipeline_mode<synchronous>, transform_indices = @transform_4, window_bounds = array<i64: 1, 96>}, {pipeline_mode = #tpu.pipeline_mode<synchronous>, transform_indices = @transform_5, window_bounds = array<i64: 96, 24>}, {pipeline_mode = #tpu.pipeline_mode<synchronous>, transform_indices = @transform_6, window_bounds = array<i64: 1, 24>}, {transform_indices = @transform_7, window_bounds = array<i64: 16, 24>}]} {
    %c0 = arith.constant 0 : index
    %c0_0 = arith.constant 0 : index
    %0 = vector.load %arg1[%c0, %c0_0] : memref<16x32xf32, #tpu.memory_space<vmem>>, vector<16x32xf32>
    %1 = arith.truncf %0 : vector<16x32xf32> to vector<16x32xbf16>
    %c0_1 = arith.constant 0 : index
    %c0_2 = arith.constant 0 : index
    %2 = vector.load %arg2[%c0_1, %c0_2] : memref<32x32xbf16, #tpu.memory_space<vmem>>, vector<32x32xbf16>
    %cst = arith.constant dense<0.000000e+00> : vector<16x32xf32>
    %3 = tpu.matmul %1, %2, %cst {dimension_numbers = #tpu.dot_dimension_numbers<[1], [0], [0], [1], [0, 0, 1, 1], [], []>} : vector<16x32xbf16>, vector<32x32xbf16>, vector<16x32xf32> -> vector<16x32xf32>
    %c0_3 = arith.constant 0 : index
    %c0_4 = arith.constant 0 : index
    %4 = vector.load %arg3[%c0_3, %c0_4] : memref<1x32xf32, #tpu.memory_space<vmem>>, vector<1x32xf32>
    %5 = vector.broadcast %4 : vector<1x32xf32> to vector<16x32xf32>
    %6 = arith.addf %3, %5 : vector<16x32xf32>
    %cst_5 = arith.constant 0.000000e+00 : f32
    %7 = vector.broadcast %cst_5 : f32 to vector<16x32xf32>
    %8 = arith.maximumf %6, %7 : vector<16x32xf32>
    %9 = arith.truncf %8 : vector<16x32xf32> to vector<16x32xbf16>
    %c0_6 = arith.constant 0 : index
    %c0_7 = arith.constant 0 : index
    %10 = vector.load %arg4[%c0_6, %c0_7] : memref<32x96xbf16, #tpu.memory_space<vmem>>, vector<32x96xbf16>
    %cst_8 = arith.constant dense<0.000000e+00> : vector<16x96xf32>
    %11 = tpu.matmul %9, %10, %cst_8 {dimension_numbers = #tpu.dot_dimension_numbers<[1], [0], [0], [1], [0, 0, 1, 1], [], []>} : vector<16x32xbf16>, vector<32x96xbf16>, vector<16x96xf32> -> vector<16x96xf32>
    %c0_9 = arith.constant 0 : index
    %c0_10 = arith.constant 0 : index
    %12 = vector.load %arg5[%c0_9, %c0_10] : memref<1x96xf32, #tpu.memory_space<vmem>>, vector<1x96xf32>
    %13 = vector.broadcast %12 : vector<1x96xf32> to vector<16x96xf32>
    %14 = arith.addf %11, %13 : vector<16x96xf32>
    %cst_11 = arith.constant 0.000000e+00 : f32
    %15 = vector.broadcast %cst_11 : f32 to vector<16x96xf32>
    %16 = arith.maximumf %14, %15 : vector<16x96xf32>
    %17 = arith.truncf %16 : vector<16x96xf32> to vector<16x96xbf16>
    %c0_12 = arith.constant 0 : index
    %c0_13 = arith.constant 0 : index
    %18 = vector.load %arg6[%c0_12, %c0_13] : memref<96x24xbf16, #tpu.memory_space<vmem>>, vector<96x24xbf16>
    %cst_14 = arith.constant dense<0.000000e+00> : vector<16x24xf32>
    %19 = tpu.matmul %17, %18, %cst_14 {dimension_numbers = #tpu.dot_dimension_numbers<[1], [0], [0], [1], [0, 0, 1, 1], [], []>} : vector<16x96xbf16>, vector<96x24xbf16>, vector<16x24xf32> -> vector<16x24xf32>
    %c0_15 = arith.constant 0 : index
    %c0_16 = arith.constant 0 : index
    %20 = vector.load %arg7[%c0_15, %c0_16] : memref<1x24xf32, #tpu.memory_space<vmem>>, vector<1x24xf32>
    %21 = vector.broadcast %20 : vector<1x24xf32> to vector<16x24xf32>
    %22 = arith.addf %19, %21 : vector<16x24xf32>
    %c0_17 = arith.constant 0 : index
    %c0_18 = arith.constant 0 : index
    %23 = vector.load %arg8[%c0_17, %c0_18] : memref<16x24xf32, #tpu.memory_space<vmem>>, vector<16x24xf32>
    tpu.vector_store %arg8[%c0_17, %c0_18], %22 {strides = array<i32>} : memref<16x24xf32, #tpu.memory_space<vmem>>, vector<16x24xf32>,
    return
  }
  func.func @transform_0(%arg0: i32) -> (i32, i32) {
    %c0_i32 = arith.constant 0 : i32
    %c0_i32_0 = arith.constant 0 : i32
    return %arg0, %c0_i32 : i32, i32
  }
  func.func @transform_1(%arg0: i32) -> (i32, i32) {
    %c0_i32 = arith.constant 0 : i32
    %c0_i32_0 = arith.constant 0 : i32
    %c0_i32_1 = arith.constant 0 : i32
    return %c0_i32, %c0_i32_0 : i32, i32
  }
  func.func @transform_2(%arg0: i32) -> (i32, i32) {
    %c0_i32 = arith.constant 0 : i32
    %c0_i32_0 = arith.constant 0 : i32
    %c0_i32_1 = arith.constant 0 : i32
    return %c0_i32, %c0_i32_0 : i32, i32
  }
  func.func @transform_3(%arg0: i32) -> (i32, i32) {
    %c0_i32 = arith.constant 0 : i32
    %c0_i32_0 = arith.constant 0 : i32
    %c0_i32_1 = arith.constant 0 : i32
    return %c0_i32, %c0_i32_0 : i32, i32
  }
  func.func @transform_4(%arg0: i32) -> (i32, i32) {
    %c0_i32 = arith.constant 0 : i32
    %c0_i32_0 = arith.constant 0 : i32
    %c0_i32_1 = arith.constant 0 : i32
    return %c0_i32, %c0_i32_0 : i32, i32
  }
  func.func @transform_5(%arg0: i32) -> (i32, i32) {
    %c0_i32 = arith.constant 0 : i32
    %c0_i32_0 = arith.constant 0 : i32
    %c0_i32_1 = arith.constant 0 : i32
    return %c0_i32, %c0_i32_0 : i32, i32
  }
  func.func @transform_6(%arg0: i32) -> (i32, i32) {
    %c0_i32 = arith.constant 0 : i32
    %c0_i32_0 = arith.constant 0 : i32
    %c0_i32_1 = arith.constant 0 : i32
    return %c0_i32, %c0_i32_0 : i32, i32
  }
  func.func @transform_7(%arg0: i32) -> (i32, i32) {
    %c0_i32 = arith.constant 0 : i32
    %c0_i32_0 = arith.constant 0 : i32
    return %arg0, %c0_i32 : i32, i32
  }
}

</mosaic_0001>

<llo_original>
// kernel: tpu_custom_call.1
$region0: #{tpu_custom_call.1}
  #allocation0 [shape = 'u32[]', space=smem, size = 0x4, offset = 0x4, fixed_abs, tag = 'smem constant byte address 0x4 - core index']
  #allocation1 [shape = 'u32[72,128]{1,0:T(1,128)}', space=vmem, size = 0x9000, scoped, tag = 'internal scratch']
  %s0 = inlined_call_operand.vmem [shape: f32[20,32], index: 0, kind: input, shape index: {}]
  %s1 = inlined_call_operand.vmem [shape: bf16[32,32], index: 1, kind: input, shape index: {}]
  %s2 = inlined_call_operand.vmem [shape: f32[1,32], index: 2, kind: input, shape index: {}]
  %s3 = inlined_call_operand.vmem [shape: bf16[32,96], index: 3, kind: input, shape index: {}]
  %s4 = inlined_call_operand.vmem [shape: f32[1,96], index: 4, kind: input, shape index: {}]
  %s5 = inlined_call_operand.vmem [shape: bf16[96,24], index: 5, kind: input, shape index: {}]
  %s6 = inlined_call_operand.vmem [shape: f32[1,24], index: 6, kind: input, shape index: {}]
  %s7 = inlined_call_operand.hbm [shape: f32[20,24], index: 7, kind: output, shape index: {}]
  %s8 = sld [smem:[#allocation0]]
  $region61: #{tpu_custom_call.1} parent=0
    _
  %s10 = ssub.s32 1, %s8
  %s11 = scalar_select 0, %s10, %s8
  $region1: #{tpu_custom_call.1} parent=0
    #allocation2 [shape = 'u8[16384]{0}', space=vmem, size = 0x4000, scoped, tag = 'output window, operand 0']
    #allocation3 [shape = 's32[2]{0}', space=sflag, size = 0x8, scoped, tag = 'scoped memory for tpu_custom_call.1']
    %12 = vsyncpa [#allocation3], 0
    %s13 = scalar_lea.sflag [#allocation3], 1
    %14 = vsyncpa %s13, 0
    loop: start=0, step=1, limit=4
    $region2: #{tpu_custom_call.1} parent=1 // loop_pre_header
      _
    $region3: #{tpu_custom_call.1} parent=1 // loop_header
      %s16 = sphi 0, %s20
      %p17 = scmp.ge.s32.totalorder %s16, 4
      %s26 = sphi 0, %s28
      %s29 = sphi 0, %s26
      %s30 = sphi 0, %s29
      %s46 = sphi 0, %s30
      %s50 = sphi 0, %s50
      %s52 = sphi 0, %s50
      %s53 = sphi 0, %s52
      %s67 = sphi 0, %s53
      %s71 = sphi 0, %s71
      %s73 = sphi 0, %s71
      %s74 = sphi 0, %s73
      %s88 = sphi 0, %s74
      %s92 = sphi 0, %s92
      %s94 = sphi 0, %s92
      %s95 = sphi 0, %s94
      %s109 = sphi 0, %s95
      %s113 = sphi 0, %s113
      %s115 = sphi 0, %s113
      %s116 = sphi 0, %s115
      %s130 = sphi 0, %s116
      %s134 = sphi 0, %s134
      %s136 = sphi 0, %s134
      %s137 = sphi 0, %s136
      %s151 = sphi 0, %s137
      %s155 = sphi 0, %s155
      %s157 = sphi 0, %s155
      %s158 = sphi 0, %s157
      %s172 = sphi 0, %s158
      %s178 = sphi 0, %s180
      %s181 = sphi 0, %s178
      %s182 = sphi 0, %s181
      %s198 = sphi 0, %s182
    $region4: #{tpu_custom_call.1} parent=1 // loop_header_branch
      %19 = sbr.rel (%p17) target = $region8
    $region5: #{tpu_custom_call.1} parent=1 // loop_body
      %s21 = ssub.s32 %s16, 1
      %s22 = ssub.s32 %s16, 2
      %s23 = sadd.s32 %s16, 1
      %s24 = ssub.s32 %s16, %s23
      %p25 = scmp.eq.s32.totalorder %s24, 0
      %s27 = sadd.s32 %s26, 1
      %s28 = scalar_select %p25, %s26, %s27
      %p31 = pneg %p25
      %p32 = scmp.eq.s32.totalorder %s16, 1
      %p33 = por %p31, %p32
      %p34 = scmp.ne.s32.totalorder %s26, %s29
      %p35 = scmp.eq.s32.totalorder %s16, 0
      %p36 = por %p34, %p35
      %p37 = scmp.ne.s32.totalorder %s26, %s29
      %p38 = scmp.eq.s32.totalorder %s21, 1
      %p39 = por %p37, %p38
      %p40 = scmp.ne.s32.totalorder %s29, %s30
      %p41 = scmp.eq.s32.totalorder %s21, 0
      %p42 = por %p40, %p41
      %p43 = scmp.ne.s32.totalorder %s29, %s30
      %p44 = scmp.eq.s32.totalorder %s22, 1
      %p45 = por %p43, %p44
      %p47 = scmp.ne.s32.totalorder %s30, %s46
      %p48 = scmp.eq.s32.totalorder %s22, 0
      %p49 = por %p47, %p48
      %s51 = sadd.s32 %s50, 1
      %p54 = scmp.eq.s32.totalorder %s16, 1
      %p55 = scmp.ne.s32.totalorder %s50, %s52
      %p56 = scmp.eq.s32.totalorder %s16, 0
      %p57 = por %p55, %p56
      %p58 = scmp.ne.s32.totalorder %s50, %s52
      %p59 = scmp.eq.s32.totalorder %s21, 1
      %p60 = por %p58, %p59
      %p61 = scmp.ne.s32.totalorder %s52, %s53
      %p62 = scmp.eq.s32.totalorder %s21, 0
      %p63 = por %p61, %p62
      %p64 = scmp.ne.s32.totalorder %s52, %s53
      %p65 = scmp.eq.s32.totalorder %s22, 1
      %p66 = por %p64, %p65
      %p68 = scmp.ne.s32.totalorder %s53, %s67
      %p69 = scmp.eq.s32.totalorder %s22, 0
      %p70 = por %p68, %p69
      %s72 = sadd.s32 %s71, 1
      %p75 = scmp.eq.s32.totalorder %s16, 1
      %p76 = scmp.ne.s32.totalorder %s71, %s73
      %p77 = scmp.eq.s32.totalorder %s16, 0
      %p78 = por %p76, %p77
      %p79 = scmp.ne.s32.totalorder %s71, %s73
      %p80 = scmp.eq.s32.totalorder %s21, 1
      %p81 = por %p79, %p80
      %p82 = scmp.ne.s32.totalorder %s73, %s74
      %p83 = scmp.eq.s32.totalorder %s21, 0
      %p84 = por %p82, %p83
      %p85 = scmp.ne.s32.totalorder %s73, %s74
      %p86 = scmp.eq.s32.totalorder %s22, 1
      %p87 = por %p85, %p86
      %p89 = scmp.ne.s32.totalorder %s74, %s88
      %p90 = scmp.eq.s32.totalorder %s22, 0
      %p91 = por %p89, %p90
      %s93 = sadd.s32 %s92, 1
      %p96 = scmp.eq.s32.totalorder %s16, 1
      %p97 = scmp.ne.s32.totalorder %s92, %s94
      %p98 = scmp.eq.s32.totalorder %s16, 0
      %p99 = por %p97, %p98
      %p100 = scmp.ne.s32.totalorder %s92, %s94
      %p101 = scmp.eq.s32.totalorder %s21, 1
      %p102 = por %p100, %p101
      %p103 = scmp.ne.s32.totalorder %s94, %s95
      %p104 = scmp.eq.s32.totalorder %s21, 0
      %p105 = por %p103, %p104
      %p106 = scmp.ne.s32.totalorder %s94, %s95
      %p107 = scmp.eq.s32.totalorder %s22, 1
      %p108 = por %p106, %p107
      %p110 = scmp.ne.s32.totalorder %s95, %s109
      %p111 = scmp.eq.s32.totalorder %s22, 0
      %p112 = por %p110, %p111
      %s114 = sadd.s32 %s113, 1
      %p117 = scmp.eq.s32.totalorder %s16, 1
      %p118 = scmp.ne.s32.totalorder %s113, %s115
      %p119 = scmp.eq.s32.totalorder %s16, 0
      %p120 = por %p118, %p119
      %p121 = scmp.ne.s32.totalorder %s113, %s115
      %p122 = scmp.eq.s32.totalorder %s21, 1
      %p123 = por %p121, %p122
      %p124 = scmp.ne.s32.totalorder %s115, %s116
      %p125 = scmp.eq.s32.totalorder %s21, 0
      %p126 = por %p124, %p125
      %p127 = scmp.ne.s32.totalorder %s115, %s116
      %p128 = scmp.eq.s32.totalorder %s22, 1
      %p129 = por %p127, %p128
      %p131 = scmp.ne.s32.totalorder %s116, %s130
      %p132 = scmp.eq.s32.totalorder %s22, 0
      %p133 = por %p131, %p132
      %s135 = sadd.s32 %s134, 1
      %p138 = scmp.eq.s32.totalorder %s16, 1
      %p139 = scmp.ne.s32.totalorder %s134, %s136
      %p140 = scmp.eq.s32.totalorder %s16, 0
      %p141 = por %p139, %p140
      %p142 = scmp.ne.s32.totalorder %s134, %s136
      %p143 = scmp.eq.s32.totalorder %s21, 1
      %p144 = por %p142, %p143
      %p145 = scmp.ne.s32.totalorder %s136, %s137
      %p146 = scmp.eq.s32.totalorder %s21, 0
      %p147 = por %p145, %p146
      %p148 = scmp.ne.s32.totalorder %s136, %s137
      %p149 = scmp.eq.s32.totalorder %s22, 1
      %p150 = por %p148, %p149
      %p152 = scmp.ne.s32.totalorder %s137, %s151
      %p153 = scmp.eq.s32.totalorder %s22, 0
      %p154 = por %p152, %p153
      %s156 = sadd.s32 %s155, 1
      %p159 = scmp.eq.s32.totalorder %s16, 1
      %p160 = scmp.ne.s32.totalorder %s155, %s157
      %p161 = scmp.eq.s32.totalorder %s16, 0
      %p162 = por %p160, %p161
      %p163 = scmp.ne.s32.totalorder %s155, %s157
      %p164 = scmp.eq.s32.totalorder %s21, 1
      %p165 = por %p163, %p164
      %p166 = scmp.ne.s32.totalorder %s157, %s158
      %p167 = scmp.eq.s32.totalorder %s21, 0
      %p168 = por %p166, %p167
      %p169 = scmp.ne.s32.totalorder %s157, %s158
      %p170 = scmp.eq.s32.totalorder %s22, 1
      %p171 = por %p169, %p170
      %p173 = scmp.ne.s32.totalorder %s158, %s172
      %p174 = scmp.eq.s32.totalorder %s22, 0
      %p175 = por %p173, %p174
      %s176 = ssub.s32 %s16, %s23
      %p177 = scmp.eq.s32.totalorder %s176, 0
      %s179 = sadd.s32 %s178, 1
      %s180 = scalar_select %p177, %s178, %s179
      %p183 = pneg %p177
      %p184 = scmp.eq.s32.totalorder %s16, 1
      %p185 = por %p183, %p184
      %p186 = scmp.ne.s32.totalorder %s178, %s181
      %p187 = scmp.eq.s32.totalorder %s16, 0
      %p188 = por %p186, %p187
      %p189 = scmp.ne.s32.totalorder %s178, %s181
      %p190 = scmp.eq.s32.totalorder %s21, 1
      %p191 = por %p189, %p190
      %p192 = scmp.ne.s32.totalorder %s181, %s182
      %p193 = scmp.eq.s32.totalorder %s21, 0
      %p194 = por %p192, %p193
      %p195 = scmp.ne.s32.totalorder %s181, %s182
      %p196 = scmp.eq.s32.totalorder %s22, 1
      %p197 = por %p195, %p196
      %p199 = scmp.ne.s32.totalorder %s182, %s198
      %p200 = scmp.eq.s32.totalorder %s22, 0
      %p201 = por %p199, %p200
      %p202 = scmp.le.s32.totalorder 1, %s16
      %p203 = scmp.lt.s32.totalorder %s16, 3
      %p204 = pnand %p202, %p203
      %p205 = pneg %p204
      // Predicated region
      $region9: #{tpu_custom_call.1} parent=5 // pred_check
        _
      $region10: #{tpu_custom_call.1} parent=5 // pred_check_branch
        %207 = sbr.rel (%p204) target = $region12
      $region11: #{tpu_custom_call.1} parent=5 // pred_region
        %s208 = ssub.s32 %s16, 1
        // Predicated region
        $region13: #{tpu_custom_call.1} parent=11 // pred_check
          %p209 = pneg %p63
        $region14: #{tpu_custom_call.1} parent=11 // pred_check_branch
          %211 = sbr.rel (%p209) target = $region16
        $region15: #{tpu_custom_call.1} parent=11 // pred_region
          _
        $region16: #{tpu_custom_call.1} parent=11 // pred_fallthru
          _
        // Predicated region
        $region17: #{tpu_custom_call.1} parent=11 // pred_check
          %p212 = pneg %p84
        $region18: #{tpu_custom_call.1} parent=11 // pred_check_branch
          %214 = sbr.rel (%p212) target = $region20
        $region19: #{tpu_custom_call.1} parent=11 // pred_region
          _
        $region20: #{tpu_custom_call.1} parent=11 // pred_fallthru
          _
        // Predicated region
        $region21: #{tpu_custom_call.1} parent=11 // pred_check
          %p215 = pneg %p105
        $region22: #{tpu_custom_call.1} parent=11 // pred_check_branch
          %217 = sbr.rel (%p215) target = $region24
        $region23: #{tpu_custom_call.1} parent=11 // pred_region
          _
        $region24: #{tpu_custom_call.1} parent=11 // pred_fallthru
          _
        // Predicated region
        $region25: #{tpu_custom_call.1} parent=11 // pred_check
          %p218 = pneg %p126
        $region26: #{tpu_custom_call.1} parent=11 // pred_check_branch
          %220 = sbr.rel (%p218) target = $region28
        $region27: #{tpu_custom_call.1} parent=11 // pred_region
          _
        $region28: #{tpu_custom_call.1} parent=11 // pred_fallthru
          _
        // Predicated region
        $region29: #{tpu_custom_call.1} parent=11 // pred_check
          %p221 = pneg %p147
        $region30: #{tpu_custom_call.1} parent=11 // pred_check_branch
          %223 = sbr.rel (%p221) target = $region32
        $region31: #{tpu_custom_call.1} parent=11 // pred_region
          _
        $region32: #{tpu_custom_call.1} parent=11 // pred_fallthru
          _
        // Predicated region
        $region33: #{tpu_custom_call.1} parent=11 // pred_check
          %p224 = pneg %p168
        $region34: #{tpu_custom_call.1} parent=11 // pred_check_branch
          %226 = sbr.rel (%p224) target = $region36
        $region35: #{tpu_custom_call.1} parent=11 // pred_region
          _
        $region36: #{tpu_custom_call.1} parent=11 // pred_fallthru
          _
      $region12: #{tpu_custom_call.1} parent=5 // pred_fallthru
        _
      %p227 = scmp.lt.s32.totalorder %s16, 2
      // Predicated region
      $region37: #{tpu_custom_call.1} parent=5 // pred_check
        %p228 = pneg %p227
      $region38: #{tpu_custom_call.1} parent=5 // pred_check_branch
        %230 = sbr.rel (%p228) target = $region40
      $region39: #{tpu_custom_call.1} parent=5 // pred_region
        // Predicated region
        $region41: #{tpu_custom_call.1} parent=39 // pred_check
          %p231 = pneg %p36
        $region42: #{tpu_custom_call.1} parent=39 // pred_check_branch
          %233 = sbr.rel (%p231) target = $region44
        $region43: #{tpu_custom_call.1} parent=39 // pred_region
          %s234 = smul.u32 2, %s16
          %s235 = ssub.s32 3, %s234
          %p236 = scmp.lt.s32.totalorder %s235, 2
          %s237 = scalar_select %p236, %s235, 2
          %s238 = smul.u32 8, %s237
          %p239 = scmp.lt.s32.totalorder %s234, 2
          %s240 = scalar_select %p239, %s234, 2
          %s241 = smul.addr %s240, 8
          %s242 = scalar_lea.vmem %s0, %s241
          %s243 = smul.u32 2, %s16
          %s244 = ssub.s32 3, %s243
          %p245 = scmp.lt.s32.totalorder %s244, 2
          %s246 = scalar_select %p245, %s244, 2
          %s247 = smul.u32 8, %s246
        $region44: #{tpu_custom_call.1} parent=39 // pred_fallthru
          _
      $region40: #{tpu_custom_call.1} parent=5 // pred_fallthru
        _
      %p248 = scmp.le.s32.totalorder 1, %s16
      %p249 = scmp.lt.s32.totalorder %s16, 3
      %p250 = pnand %p248, %p249
      %p251 = pneg %p250
      // Predicated region
      $region45: #{tpu_custom_call.1} parent=5 // pred_check
        _
      $region46: #{tpu_custom_call.1} parent=5 // pred_check_branch
        %253 = sbr.rel (%p250) target = $region48
      $region47: #{tpu_custom_call.1} parent=5 // pred_region
        %s254 = ssub.s32 %s16, 1
        %s255 = smul.u32 2, %s21
        %s256 = ssub.s32 3, %s255
        %p257 = scmp.lt.s32.totalorder %s256, 2
        %s258 = scalar_select %p257, %s256, 2
        %s259 = smul.u32 8, %s258
        %p260 = scmp.lt.s32.totalorder %s255, 2
        %s261 = scalar_select %p260, %s255, 2
        %s262 = smul.addr %s261, 8
        %s263 = scalar_lea.vmem %s0, %s262
        %p264 = pneg %p42
        %p265 = pneg %p39
        %p266 = pneg %p63
        %p267 = pneg %p60
        %p268 = pneg %p84
        %p269 = pneg %p81
        %p270 = pneg %p105
        %p271 = pneg %p102
        %p272 = pneg %p126
        %p273 = pneg %p123
        %p274 = pneg %p147
        %p275 = pneg %p144
        %p276 = pneg %p168
        %p277 = pneg %p165
        %p278 = pneg %p194
        %p279 = pneg %p191
        %s280 = sand.u32 %s181, 1
        %s281 = scalar_lea.sflag [#allocation3], %s280
        %s282 = sand.u32 %s181, 1
        %s283 = smul.addr %s282, 16
        %s284 = scalar_lea.vmem [#allocation2], %s283
        %s285 = smul.u32 2, %s21
        %s286 = ssub.s32 3, %s285
        %p287 = scmp.lt.s32.totalorder %s286, 2
        %s288 = scalar_select %p287, %s286, 2
        %s289 = smul.u32 8, %s288
        %p290 = scmp.lt.s32.totalorder %s285, 2
        %s291 = scalar_select %p290, %s285, 2
        %s292 = smul.addr %s291, 8
        %s293 = scalar_lea.vmem %s0, %s292
        %s294 = smul.u32 2, %s21
        %s295 = ssub.s32 3, %s294
        %p296 = scmp.lt.s32.totalorder %s295, 2
        %s297 = scalar_select %p296, %s295, 2
        %s298 = smul.u32 8, %s297
        %s299 = smul.u32 2, %s21
        %s300 = ssub.s32 3, %s299
        %p301 = scmp.lt.s32.totalorder %s300, 2
        %s302 = scalar_select %p301, %s300, 2
        %s303 = smul.u32 8, %s302
        %v305 = vld [vmem:[%s293] sm:$0xff]
        %v306 = vld [vmem:[%s293 + $0x8] sm:$0xff]
        %v307 = vpack.c.bf16 %v306, %v305
        %v308 = vld [vmem:[%s1] sm:$0xf]
        %v309 = vld [vmem:[%s1 + $0x4] sm:$0xf]
        %v310 = vld [vmem:[%s1 + $0x8] sm:$0xf]
        %v311 = vld [vmem:[%s1 + $0xc] sm:$0xf]
        %v312 = vld [vmem:[%s2] sm:$0x1]
        %v314 = vperm.slane %v312, 0
        %v320 = vunpack.c.l.b16 %v308
        %v321 = vunpack.c.l.b16 %v309
        %v322 = vunpack.c.l.b16 %v310
        %v323 = vunpack.c.l.b16 %v311
        %v324 = vpack.c.b16 %v321, %v320
        %v325 = vpack.c.b16 %v323, %v322
        %vm328 = vcmask 261120
        %v330 = vsel %vm328, %v307, 0
        %332 = vmatpush.bf16.msra.mxu0 0
        %333 = vmatpush.bf16.msra.mxu0 0
        %334 = vmatpush.bf16.msra.mxu0 0
        %335 = vmatpush.bf16.msra.mxu0 0
        %336 = vmatpush.bf16.msra.mxu0 0
        %337 = vmatpush.bf16.msra.mxu0 0
        %338 = vmatpush.bf16.msra.mxu0 %v325
        %339 = vmatpush.bf16.msra.mxu0 %v324
        %340 = vmatmul.bf16.gmra.mxu0 %v330
        %v341 = vpop.f32.mrf.mxu0
        %v342 = vadd.f32 %v314, %v341
        %v343 = vpop.f32.mrf.mxu0
        %v344 = vadd.f32 %v314, %v343
        %345 = vdwg.mxu0
        %v346 = vmax.f32 %v342, 0.0
        %v347 = vmax.f32 %v344, 0.0
        %v348 = vpack.c.bf16 %v347, %v346
        %v349 = vld [vmem:[%s3] sm:$0xf]
        %v350 = vld [vmem:[%s3 + $0x4] sm:$0xf]
        %v351 = vld [vmem:[%s3 + $0x8] sm:$0xf]
        %v352 = vld [vmem:[%s3 + $0xc] sm:$0xf]
        %v353 = vld [vmem:[%s4] sm:$0x1]
        %v355 = vperm.slane %v353, 0
        %v361 = vunpack.c.l.b16 %v349
        %v362 = vunpack.c.l.b16 %v350
        %v363 = vunpack.c.l.b16 %v351
        %v364 = vunpack.c.l.b16 %v352
        %v365 = vpack.c.b16 %v362, %v361
        %v366 = vpack.c.b16 %v364, %v363
        %v370 = vsel %vm328, %v348, 0
        %372 = vmatpush.bf16.msra.mxu0 0
        %373 = vmatpush.bf16.msra.mxu0 0
        %374 = vmatpush.bf16.msra.mxu0 0
        %375 = vmatpush.bf16.msra.mxu0 0
        %376 = vmatpush.bf16.msra.mxu0 0
        %377 = vmatpush.bf16.msra.mxu0 0
        %378 = vmatpush.bf16.msra.mxu0 %v366
        %379 = vmatpush.bf16.msra.mxu0 %v365
        %380 = vmatmul.bf16.gmra.mxu0 %v370
        %v381 = vpop.f32.mrf.mxu0
        %v382 = vadd.f32 %v355, %v381
        %v383 = vpop.f32.mrf.mxu0
        %v384 = vadd.f32 %v355, %v383
        %385 = vdwg.mxu0
        %v386 = vmax.f32 %v382, 0.0
        %v387 = vmax.f32 %v384, 0.0
        %v388 = vpack.c.bf16 %v387, %v386
        %v389 = vld [vmem:[%s5] sm:$0xf]
        %v390 = vld [vmem:[%s5 + $0x4] sm:$0xf]
        %v391 = vld [vmem:[%s5 + $0x8] sm:$0xf]
        %v392 = vld [vmem:[%s5 + $0xc] sm:$0xf]
        %v393 = vld [vmem:[%s5 + $0x10] sm:$0xf]
        %v394 = vld [vmem:[%s5 + $0x14] sm:$0xf]
        %v395 = vld [vmem:[%s5 + $0x18] sm:$0xf]
        %v396 = vld [vmem:[%s5 + $0x1c] sm:$0xf]
        %v397 = vld [vmem:[%s5 + $0x20] sm:$0xf]
        %v398 = vld [vmem:[%s5 + $0x24] sm:$0xf]
        %v399 = vld [vmem:[%s5 + $0x28] sm:$0xf]
        %v400 = vld [vmem:[%s5 + $0x2c] sm:$0xf]
        %v401 = vld [vmem:[%s6] sm:$0x1]
        %v403 = vperm.slane %v401, 0
        %v417 = vunpack.c.l.b16 %v389
        %v418 = vunpack.c.l.b16 %v390
        %v419 = vunpack.c.l.b16 %v391
        %v420 = vunpack.c.l.b16 %v392
        %v421 = vunpack.c.l.b16 %v393
        %v422 = vunpack.c.l.b16 %v394
        %v423 = vunpack.c.l.b16 %v395
        %v424 = vunpack.c.l.b16 %v396
        %v425 = vunpack.c.l.b16 %v397
        %v426 = vunpack.c.l.b16 %v398
        %v427 = vunpack.c.l.b16 %v399
        %v428 = vunpack.c.l.b16 %v400
        %v429 = vpack.c.b16 %v418, %v417
        %v430 = vpack.c.b16 %v420, %v419
        %v431 = vpack.c.b16 %v422, %v421
        %v432 = vpack.c.b16 %v424, %v423
        %v433 = vpack.c.b16 %v426, %v425
        %v434 = vpack.c.b16 %v428, %v427
        %vm441 = vcmask 785408
        %v443 = vsel %vm441, %v388, 0
        %445 = vmatpush.bf16.msra.mxu0 0
        %446 = vmatpush.bf16.msra.mxu0 0
        %447 = vmatpush.bf16.msra.mxu0 %v434
        %448 = vmatpush.bf16.msra.mxu0 %v433
        %449 = vmatpush.bf16.msra.mxu0 %v432
        %450 = vmatpush.bf16.msra.mxu0 %v431
        %451 = vmatpush.bf16.msra.mxu0 %v430
        %452 = vmatpush.bf16.msra.mxu0 %v429
        %453 = vmatmul.bf16.gmra.mxu0 %v443
        %v454 = vpop.f32.mrf.mxu0
        %v455 = vadd.f32 %v403, %v454
        %v456 = vpop.f32.mrf.mxu0
        %v457 = vadd.f32 %v403, %v456
        %458 = vdwg.mxu0
        %vm459 = vcmask 195584
        %460 = vst.msk [vmem:[%s284] sm:$0xff] %vm459, %v455
        %461 = vst.msk [vmem:[%s284 + $0x8] sm:$0xff] %vm459, %v457
        %s462 = sand.u32 %s181, 1
        %s463 = scalar_lea.sflag [#allocation3], %s462
        %s464 = sand.u32 %s181, 1
        %s465 = smul.addr %s464, 16
        %s466 = scalar_lea.vmem [#allocation2], %s465
        // Predicated region
        $region49: #{tpu_custom_call.1} parent=47 // pred_check
          %p467 = pneg %p191
        $region50: #{tpu_custom_call.1} parent=47 // pred_check_branch
          %469 = sbr.rel (%p467) target = $region52
        $region51: #{tpu_custom_call.1} parent=47 // pred_region
          %s470 = smul.u32 2, %s21
          %s471 = ssub.s32 3, %s470
          %p472 = scmp.lt.s32.totalorder %s471, 2
          %s473 = scalar_select %p472, %s471, 2
          %s474 = smul.u32 8, %s473
          %s475 = ssub.s32 16, %s474
          %s476 = sshll.u32 %s475, 4
          %477 = vsyncadd %s463, %s476
          %p478 = scmp.ne.s32.totalorder 0, %s474
          %s479 = smul.addr %s470, 8
          %s480 = scalar_lea.hbm %s7, %s479
          %s481 = smul.u32 8, %s473
          %s482 = sshll.u32 %s466, 4
          %s483 = int_to_ptr.vmem [resolvable:$true] %s482
          %s484 = sshll.u32 %s480, 4
          %s485 = int_to_ptr.hbm [resolvable:$true] %s484
          %s486 = sshll.u32 %s481, 4
          %490 = dma.vmem_to_hbm [thread:$0]  (%p478), %s483, %s486, %s485, %s463, 128, 128, 8
        $region52: #{tpu_custom_call.1} parent=47 // pred_fallthru
          _
      $region48: #{tpu_custom_call.1} parent=5 // pred_fallthru
        _
      %p491 = scmp.le.s32.totalorder 2, %s16
      // Predicated region
      $region53: #{tpu_custom_call.1} parent=5 // pred_check
        %p492 = pneg %p491
      $region54: #{tpu_custom_call.1} parent=5 // pred_check_branch
        %494 = sbr.rel (%p492) target = $region56
      $region55: #{tpu_custom_call.1} parent=5 // pred_region
        %s495 = ssub.s32 %s16, 2
        // Predicated region
        $region57: #{tpu_custom_call.1} parent=55 // pred_check
          %p496 = pneg %p197
        $region58: #{tpu_custom_call.1} parent=55 // pred_check_branch
          %498 = sbr.rel (%p496) target = $region60
        $region59: #{tpu_custom_call.1} parent=55 // pred_region
          %s499 = sand.u32 %s182, 1
          %s500 = scalar_lea.sflag [#allocation3], %s499
          %s501 = sand.u32 %s182, 1
          %s502 = smul.addr %s501, 16
          %s503 = scalar_lea.vmem [#allocation2], %s502
          %505 = dma.done %s500, 256
        $region60: #{tpu_custom_call.1} parent=55 // pred_fallthru
          _
      $region56: #{tpu_custom_call.1} parent=5 // pred_fallthru
        _
    $region6: #{tpu_custom_call.1} parent=1 // loop_footer
      %s20 = sadd.s32 1, %s16
    $region7: #{tpu_custom_call.1} parent=1 // loop_footer_branch
      %15 = sbr.rel target = $region3
    $region8: #{tpu_custom_call.1} parent=1 // loop_exit
      _
    %506 = vsyncpa [#allocation3], 1
    %s507 = scalar_lea.sflag [#allocation3], 1
    %508 = vsyncpa %s507, 1

</llo_original>
